<compile_context>
chip_gen: v7x
topology: tpu7x:2x2x1
jax: 0.10.0
libtpu: 0.0.40
codegen_flags: <defaults>
</compile_context>

<pallas_src>
import jax
import jax.numpy as jnp
from jax.experimental import pallas as pl
from jax.experimental.pallas import tpu as pltpu


def _make_kernel(inv_n3: float, inv_n: float):
    """inv_n3 = 1/(3*batch), inv_n = 1/batch for the true (unpadded) batch size."""

    def kernel(lam_ref, p_ref, l_ref, out_ref, acc_ref):
        step = pl.program_id(0)

        @pl.when(step == 0)
        def _init():
            acc_ref[...] = jnp.zeros_like(acc_ref)

        # Blocks are (6, 8, tl).  Leading-axis slices select whole aligned (8, tl)
        # tiles (mic = components 0:3, src = components 3:6), so every subtract below
        # is a straight, fully-dense VPU op.
        p_mic = p_ref[0:3]      # (3, 8, tl)
        p_src = p_ref[3:6]
        t_mic = l_ref[0:3]
        t_src = l_ref[3:6]

        c = jnp.float32(0.5)

        # mic / src losses: MSE(|t - c|, |p - c|)
        d_mic = jnp.abs(t_mic - c) - jnp.abs(p_mic - c)
        d_src = jnp.abs(t_src - c) - jnp.abs(p_src - c)

        # Shared symmetric term: |t_src - t_mic| == |t_mic - t_src| == |td|.
        td = t_mic - t_src
        abs_td = jnp.abs(td)
        d_msv = abs_td - jnp.abs(p_src - t_mic)   # MSE(|t_src-t_mic|, |p_src-t_mic|)
        d_smv = abs_td - jnp.abs(p_mic - t_src)   # MSE(|t_mic-t_src|, |p_mic-t_src|)

        # Distance loss: MSE(||p_mic - p_src||_2, ||t_mic - t_src||_2) per sample.
        pd = p_mic - p_src
        pd2 = pd * pd
        td2 = td * td

        def csum(x):            # (3, 8, tl) -> (8, tl): aligned, dense VPU adds
            return x[0] + x[1] + x[2]

        d_dist = jnp.sqrt(csum(pd2)) - jnp.sqrt(csum(td2))

        # Per-lane partial sums in VMEM; no cross-lane (XLU) work until finalize.
        acc_ref[0] = acc_ref[0] + csum(d_mic * d_mic)
        acc_ref[1] = acc_ref[1] + csum(d_src * d_src)
        acc_ref[2] = acc_ref[2] + csum(d_msv * d_msv)
        acc_ref[3] = acc_ref[3] + csum(d_smv * d_smv)
        acc_ref[4] = acc_ref[4] + d_dist * d_dist

        @pl.when(step == pl.num_programs(0) - 1)
        def _finalize():
            mic = jnp.sum(acc_ref[0]) * inv_n3
            src = jnp.sum(acc_ref[1]) * inv_n3
            msv = jnp.sum(acc_ref[2]) * inv_n3
            smv = jnp.sum(acc_ref[3]) * inv_n3
            dst = jnp.sum(acc_ref[4]) * inv_n
            out_ref[0] = mic
            out_ref[1] = src
            out_ref[2] = msv
            out_ref[3] = smv
            out_ref[4] = dst
            out_ref[5] = (mic * lam_ref[0] + src * lam_ref[1] + msv * lam_ref[2]
                          + smv * lam_ref[3] + dst * lam_ref[4])
            out_ref[6] = jnp.float32(0.0)
            out_ref[7] = jnp.float32(0.0)

    return kernel


def _round_up(x, m):
    return ((x + m - 1) // m) * m


def mic_src_configuration_loss(proposed_z_batch, label_z_batch,
                               return_separate_losses=True,
                               lambdas=None, block_b=65536):
    """Pallas implementation of MicSrcConfigurationLoss.forward.

    proposed_z_batch, label_z_batch: (batch, 10) arrays.
    Returns the 5 scalar losses, or their lambda-weighted sum if
    return_separate_losses=False.
    """
    assert proposed_z_batch.shape == label_z_batch.shape
    assert proposed_z_batch.shape[1] == 10
    if lambdas is None:
        lambdas = {'mic': 1, 'src': 1, 'mic_src_vector': 1,
                   'src_mic_vector': 1, 'mic_src_distance': 1}

    b = proposed_z_batch.shape[0]

    # Tile selection: batch is folded onto (sublane, lane), 8*128 = 1024 samples per
    # dense f32 tile.  Keep padding waste bounded (<1024 samples per grid step).
    n_tiles = max(1, -(-b // block_b))
    tb = _round_up(-(-b // n_tiles), 1024)    # samples per grid step
    padded_b = n_tiles * tb
    tl = tb // 8                              # lanes per grid step

    def pack(x):
        # (B, 10) -> slice 6 used features -> pad batch -> (6, 8, padded_b/8).
        # Zero-padded samples match in both inputs -> contribute 0 to every loss.
        x6 = jnp.asarray(x, jnp.float32)[:, 3:9]
        if padded_b != b:
            x6 = jnp.pad(x6, ((0, padded_b - b), (0, 0)))
        return x6.T.reshape(6, 8, padded_b // 8)

    p = pack(proposed_z_batch)
    l = pack(label_z_batch)

    lam = jnp.array(
        [lambdas['mic'], lambdas['src'], lambdas['mic_src_vector'],
         lambdas['src_mic_vector'], lambdas['mic_src_distance'], 0.0, 0.0, 0.0],
        dtype=jnp.float32)

    out = pl.pallas_call(
        _make_kernel(1.0 / (3.0 * b), 1.0 / b),
        out_shape=jax.ShapeDtypeStruct((8,), jnp.float32),
        grid=(n_tiles,),
        in_specs=[
            pl.BlockSpec(memory_space=pltpu.MemorySpace.SMEM),    # lambda weights
            pl.BlockSpec((6, 8, tl), lambda i: (0, 0, i)),        # packed proposed
            pl.BlockSpec((6, 8, tl), lambda i: (0, 0, i)),        # packed label
        ],
        out_specs=pl.BlockSpec(memory_space=pltpu.MemorySpace.SMEM),
        scratch_shapes=[pltpu.VMEM((5, 8, tl), jnp.float32)],
        compiler_params=pltpu.CompilerParams(
            dimension_semantics=("arbitrary",)),
    )(lam, p, l)

    if return_separate_losses:
        return out[0], out[1], out[2], out[3], out[4]
    return out[5]


def _reference(proposed, label):
    """Pure-JAX reference matching the PyTorch module."""
    c = 0.5
    p_mic, p_src = proposed[:, 3:6], proposed[:, 6:9]
    t_mic, t_src = label[:, 3:6], label[:, 6:9]
    mse = lambda a, b: jnp.mean((a - b) ** 2)
    mic = mse(jnp.abs(t_mic - c), jnp.abs(p_mic - c))
    src = mse(jnp.abs(t_src - c), jnp.abs(p_src - c))
    msv = mse(jnp.abs(t_src - t_mic), jnp.abs(p_src - t_mic))
    smv = mse(jnp.abs(t_mic - t_src), jnp.abs(p_mic - t_src))
    dist = mse(jnp.linalg.norm(p_mic - p_src, axis=1),
               jnp.linalg.norm(t_mic - t_src, axis=1))
    return mic, src, msv, smv, dist


if __name__ == "__main__":
    key = jax.random.PRNGKey(0)
    k1, k2, k3, k4 = jax.random.split(key, 4)

    # Small case: single grid step.
    batch = 8
    proposed = jax.random.uniform(k1, (batch, 10), dtype=jnp.float32)
    label = jax.random.uniform(k2, (batch, 10), dtype=jnp.float32)

    losses = mic_src_configuration_loss(proposed, label,
                                        return_separate_losses=True)
    losses = jax.block_until_ready(losses)
    ref = _reference(proposed, label)
    for got, exp in zip(losses, ref):
        assert jnp.allclose(got, exp, atol=1e-6, rtol=1e-5), (got, exp)

    total = mic_src_configuration_loss(proposed, label,
                                       return_separate_losses=False)
    total = jax.block_until_ready(total)
    assert jnp.allclose(total, sum(ref), atol=1e-6, rtol=1e-5), (total, sum(ref))

    # Larger case exercising the batch-tiled, zero-padded, accumulating grid path.
    batch2 = 300
    proposed2 = jax.random.uniform(k3, (batch2, 10), dtype=jnp.float32)
    label2 = jax.random.uniform(k4, (batch2, 10), dtype=jnp.float32)
    losses2 = mic_src_configuration_loss(proposed2, label2,
                                         return_separate_losses=True,
                                         block_b=128)
    losses2 = jax.block_until_ready(losses2)
    ref2 = _reference(proposed2, label2)
    for got, exp in zip(losses2, ref2):
        assert jnp.allclose(got, exp, atol=1e-5, rtol=1e-5), (got, exp)

    print("KERNEL_OK")
</pallas_src>

<mosaic_0001>
module attributes {stable_mosaic.version = 11 : i64} {
  func.func @kernel(%arg0: i32, %arg1: memref<8xf32, #tpu.memory_space<smem>>, %arg2: memref<6x8x128xf32, #tpu.memory_space<vmem>>, %arg3: memref<6x8x128xf32, #tpu.memory_space<vmem>>, %arg4: memref<8xf32, #tpu.memory_space<smem>>, %arg5: memref<5x8x128xf32, #tpu.memory_space<vmem>>) attributes {dimension_semantics = [#tpu.dimension_semantics<arbitrary>], iteration_bounds = array<i64: 1>, scalar_prefetch = 0 : i64, scratch_operands = 1 : i64, tpu.core_type = #tpu.core_type<tc>, window_params = [{transform_indices = @transform_0, window_bounds = array<i64: 8>}, {transform_indices = @transform_1, window_bounds = array<i64: 6, 8, 128>}, {transform_indices = @transform_2, window_bounds = array<i64: 6, 8, 128>}, {transform_indices = @transform_3, window_bounds = array<i64: 8>}]} {
    %c0_i32 = arith.constant 0 : i32
    %0 = arith.cmpi eq, %arg0, %c0_i32 : i32
    %1 = arith.extui %0 : i1 to i32
    %c0_i32_0 = arith.constant 0 : i32
    %2 = arith.cmpi ne, %1, %c0_i32_0 : i32
    scf.if %2 {
      %cst_43 = arith.constant 0.000000e+00 : f32
      %121 = vector.broadcast %cst_43 : f32 to vector<5x8x128xf32>
      %c0_44 = arith.constant 0 : index
      %c0_45 = arith.constant 0 : index
      %c0_46 = arith.constant 0 : index
      %122 = vector.load %arg5[%c0_44, %c0_45, %c0_46] : memref<5x8x128xf32, #tpu.memory_space<vmem>>, vector<5x8x128xf32>
      tpu.vector_store %arg5[%c0_44, %c0_45, %c0_46], %121 {strides = array<i32>} : memref<5x8x128xf32, #tpu.memory_space<vmem>>, vector<5x8x128xf32>,
    } else {
    }
    %c0 = arith.constant 0 : index
    %c0_1 = arith.constant 0 : index
    %c0_2 = arith.constant 0 : index
    %3 = vector.load %arg2[%c0, %c0_1, %c0_2] : memref<6x8x128xf32, #tpu.memory_space<vmem>>, vector<3x8x128xf32>
    %c3 = arith.constant 3 : index
    %c0_3 = arith.constant 0 : index
    %c0_4 = arith.constant 0 : index
    %4 = vector.load %arg2[%c3, %c0_3, %c0_4] : memref<6x8x128xf32, #tpu.memory_space<vmem>>, vector<3x8x128xf32>
    %c0_5 = arith.constant 0 : index
    %c0_6 = arith.constant 0 : index
    %c0_7 = arith.constant 0 : index
    %5 = vector.load %arg3[%c0_5, %c0_6, %c0_7] : memref<6x8x128xf32, #tpu.memory_space<vmem>>, vector<3x8x128xf32>
    %c3_8 = arith.constant 3 : index
    %c0_9 = arith.constant 0 : index
    %c0_10 = arith.constant 0 : index
    %6 = vector.load %arg3[%c3_8, %c0_9, %c0_10] : memref<6x8x128xf32, #tpu.memory_space<vmem>>, vector<3x8x128xf32>
    %cst = arith.constant 5.000000e-01 : f32
    %7 = vector.broadcast %cst : f32 to vector<3x8x128xf32>
    %8 = arith.subf %5, %7 : vector<3x8x128xf32>
    %9 = math.absf %8 : vector<3x8x128xf32>
    %cst_11 = arith.constant 5.000000e-01 : f32
    %10 = vector.broadcast %cst_11 : f32 to vector<3x8x128xf32>
    %11 = arith.subf %3, %10 : vector<3x8x128xf32>
    %12 = math.absf %11 : vector<3x8x128xf32>
    %13 = arith.subf %9, %12 : vector<3x8x128xf32>
    %cst_12 = arith.constant 5.000000e-01 : f32
    %14 = vector.broadcast %cst_12 : f32 to vector<3x8x128xf32>
    %15 = arith.subf %6, %14 : vector<3x8x128xf32>
    %16 = math.absf %15 : vector<3x8x128xf32>
    %cst_13 = arith.constant 5.000000e-01 : f32
    %17 = vector.broadcast %cst_13 : f32 to vector<3x8x128xf32>
    %18 = arith.subf %4, %17 : vector<3x8x128xf32>
    %19 = math.absf %18 : vector<3x8x128xf32>
    %20 = arith.subf %16, %19 : vector<3x8x128xf32>
    %21 = arith.subf %5, %6 : vector<3x8x128xf32>
    %22 = math.absf %21 : vector<3x8x128xf32>
    %23 = arith.subf %4, %5 : vector<3x8x128xf32>
    %24 = math.absf %23 : vector<3x8x128xf32>
    %25 = arith.subf %22, %24 : vector<3x8x128xf32>
    %26 = arith.subf %3, %6 : vector<3x8x128xf32>
    %27 = math.absf %26 : vector<3x8x128xf32>
    %28 = arith.subf %22, %27 : vector<3x8x128xf32>
    %29 = arith.subf %3, %4 : vector<3x8x128xf32>
    %30 = arith.mulf %29, %29 : vector<3x8x128xf32>
    %31 = arith.mulf %21, %21 : vector<3x8x128xf32>
    %32 = vector.extract_strided_slice %30 {offsets = [0, 0, 0], sizes = [1, 8, 128], strides = [1, 1, 1]} : vector<3x8x128xf32> to vector<1x8x128xf32>
    %33 = vector.shape_cast %32 : vector<1x8x128xf32> to vector<8x128xf32>
    %34 = vector.extract_strided_slice %30 {offsets = [1, 0, 0], sizes = [1, 8, 128], strides = [1, 1, 1]} : vector<3x8x128xf32> to vector<1x8x128xf32>
    %35 = vector.shape_cast %34 : vector<1x8x128xf32> to vector<8x128xf32>
    %36 = arith.addf %33, %35 : vector<8x128xf32>
    %37 = vector.extract_strided_slice %30 {offsets = [2, 0, 0], sizes = [1, 8, 128], strides = [1, 1, 1]} : vector<3x8x128xf32> to vector<1x8x128xf32>
    %38 = vector.shape_cast %37 : vector<1x8x128xf32> to vector<8x128xf32>
    %39 = arith.addf %36, %38 : vector<8x128xf32>
    %40 = math.sqrt %39 : vector<8x128xf32>
    %41 = vector.extract_strided_slice %31 {offsets = [0, 0, 0], sizes = [1, 8, 128], strides = [1, 1, 1]} : vector<3x8x128xf32> to vector<1x8x128xf32>
    %42 = vector.shape_cast %41 : vector<1x8x128xf32> to vector<8x128xf32>
    %43 = vector.extract_strided_slice %31 {offsets = [1, 0, 0], sizes = [1, 8, 128], strides = [1, 1, 1]} : vector<3x8x128xf32> to vector<1x8x128xf32>
    %44 = vector.shape_cast %43 : vector<1x8x128xf32> to vector<8x128xf32>
    %45 = arith.addf %42, %44 : vector<8x128xf32>
    %46 = vector.extract_strided_slice %31 {offsets = [2, 0, 0], sizes = [1, 8, 128], strides = [1, 1, 1]} : vector<3x8x128xf32> to vector<1x8x128xf32>
    %47 = vector.shape_cast %46 : vector<1x8x128xf32> to vector<8x128xf32>
    %48 = arith.addf %45, %47 : vector<8x128xf32>
    %49 = math.sqrt %48 : vector<8x128xf32>
    %50 = arith.subf %40, %49 : vector<8x128xf32>
    %c0_14 = arith.constant 0 : index
    %c0_15 = arith.constant 0 : index
    %c0_16 = arith.constant 0 : index
    %51 = vector.load %arg5[%c0_14, %c0_15, %c0_16] : memref<5x8x128xf32, #tpu.memory_space<vmem>>, vector<1x8x128xf32>
    %52 = vector.shape_cast %51 : vector<1x8x128xf32> to vector<8x128xf32>
    %53 = arith.mulf %13, %13 : vector<3x8x128xf32>
    %54 = vector.extract_strided_slice %53 {offsets = [0, 0, 0], sizes = [1, 8, 128], strides = [1, 1, 1]} : vector<3x8x128xf32> to vector<1x8x128xf32>
    %55 = vector.shape_cast %54 : vector<1x8x128xf32> to vector<8x128xf32>
    %56 = vector.extract_strided_slice %53 {offsets = [1, 0, 0], sizes = [1, 8, 128], strides = [1, 1, 1]} : vector<3x8x128xf32> to vector<1x8x128xf32>
    %57 = vector.shape_cast %56 : vector<1x8x128xf32> to vector<8x128xf32>
    %58 = arith.addf %55, %57 : vector<8x128xf32>
    %59 = vector.extract_strided_slice %53 {offsets = [2, 0, 0], sizes = [1, 8, 128], strides = [1, 1, 1]} : vector<3x8x128xf32> to vector<1x8x128xf32>
    %60 = vector.shape_cast %59 : vector<1x8x128xf32> to vector<8x128xf32>
    %61 = arith.addf %58, %60 : vector<8x128xf32>
    %62 = arith.addf %52, %61 : vector<8x128xf32>
    %c0_17 = arith.constant 0 : index
    %c0_18 = arith.constant 0 : index
    %c0_19 = arith.constant 0 : index
    %63 = vector.load %arg5[%c0_17, %c0_18, %c0_19] : memref<5x8x128xf32, #tpu.memory_space<vmem>>, vector<1x8x128xf32>
    %64 = vector.shape_cast %63 : vector<1x8x128xf32> to vector<8x128xf32>
    %65 = vector.shape_cast %62 : vector<8x128xf32> to vector<1x8x128xf32>
    tpu.vector_store %arg5[%c0_17, %c0_18, %c0_19], %65 {strides = array<i32>} : memref<5x8x128xf32, #tpu.memory_space<vmem>>, vector<1x8x128xf32>,
    %c1 = arith.constant 1 : index
    %c0_20 = arith.constant 0 : index
    %c0_21 = arith.constant 0 : index
    %66 = vector.load %arg5[%c1, %c0_20, %c0_21] : memref<5x8x128xf32, #tpu.memory_space<vmem>>, vector<1x8x128xf32>
    %67 = vector.shape_cast %66 : vector<1x8x128xf32> to vector<8x128xf32>
    %68 = arith.mulf %20, %20 : vector<3x8x128xf32>
    %69 = vector.extract_strided_slice %68 {offsets = [0, 0, 0], sizes = [1, 8, 128], strides = [1, 1, 1]} : vector<3x8x128xf32> to vector<1x8x128xf32>
    %70 = vector.shape_cast %69 : vector<1x8x128xf32> to vector<8x128xf32>
    %71 = vector.extract_strided_slice %68 {offsets = [1, 0, 0], sizes = [1, 8, 128], strides = [1, 1, 1]} : vector<3x8x128xf32> to vector<1x8x128xf32>
    %72 = vector.shape_cast %71 : vector<1x8x128xf32> to vector<8x128xf32>
    %73 = arith.addf %70, %72 : vector<8x128xf32>
    %74 = vector.extract_strided_slice %68 {offsets = [2, 0, 0], sizes = [1, 8, 128], strides = [1, 1, 1]} : vector<3x8x128xf32> to vector<1x8x128xf32>
    %75 = vector.shape_cast %74 : vector<1x8x128xf32> to vector<8x128xf32>
    %76 = arith.addf %73, %75 : vector<8x128xf32>
    %77 = arith.addf %67, %76 : vector<8x128xf32>
    %c1_22 = arith.constant 1 : index
    %c0_23 = arith.constant 0 : index
    %c0_24 = arith.constant 0 : index
    %78 = vector.load %arg5[%c1_22, %c0_23, %c0_24] : memref<5x8x128xf32, #tpu.memory_space<vmem>>, vector<1x8x128xf32>
    %79 = vector.shape_cast %78 : vector<1x8x128xf32> to vector<8x128xf32>
    %80 = vector.shape_cast %77 : vector<8x128xf32> to vector<1x8x128xf32>
    tpu.vector_store %arg5[%c1_22, %c0_23, %c0_24], %80 {strides = array<i32>} : memref<5x8x128xf32, #tpu.memory_space<vmem>>, vector<1x8x128xf32>,
    %c2 = arith.constant 2 : index
    %c0_25 = arith.constant 0 : index
    %c0_26 = arith.constant 0 : index
    %81 = vector.load %arg5[%c2, %c0_25, %c0_26] : memref<5x8x128xf32, #tpu.memory_space<vmem>>, vector<1x8x128xf32>
    %82 = vector.shape_cast %81 : vector<1x8x128xf32> to vector<8x128xf32>
    %83 = arith.mulf %25, %25 : vector<3x8x128xf32>
    %84 = vector.extract_strided_slice %83 {offsets = [0, 0, 0], sizes = [1, 8, 128], strides = [1, 1, 1]} : vector<3x8x128xf32> to vector<1x8x128xf32>
    %85 = vector.shape_cast %84 : vector<1x8x128xf32> to vector<8x128xf32>
    %86 = vector.extract_strided_slice %83 {offsets = [1, 0, 0], sizes = [1, 8, 128], strides = [1, 1, 1]} : vector<3x8x128xf32> to vector<1x8x128xf32>
    %87 = vector.shape_cast %86 : vector<1x8x128xf32> to vector<8x128xf32>
    %88 = arith.addf %85, %87 : vector<8x128xf32>
    %89 = vector.extract_strided_slice %83 {offsets = [2, 0, 0], sizes = [1, 8, 128], strides = [1, 1, 1]} : vector<3x8x128xf32> to vector<1x8x128xf32>
    %90 = vector.shape_cast %89 : vector<1x8x128xf32> to vector<8x128xf32>
    %91 = arith.addf %88, %90 : vector<8x128xf32>
    %92 = arith.addf %82, %91 : vector<8x128xf32>
    %c2_27 = arith.constant 2 : index
    %c0_28 = arith.constant 0 : index
    %c0_29 = arith.constant 0 : index
    %93 = vector.load %arg5[%c2_27, %c0_28, %c0_29] : memref<5x8x128xf32, #tpu.memory_space<vmem>>, vector<1x8x128xf32>
    %94 = vector.shape_cast %93 : vector<1x8x128xf32> to vector<8x128xf32>
    %95 = vector.shape_cast %92 : vector<8x128xf32> to vector<1x8x128xf32>
    tpu.vector_store %arg5[%c2_27, %c0_28, %c0_29], %95 {strides = array<i32>} : memref<5x8x128xf32, #tpu.memory_space<vmem>>, vector<1x8x128xf32>,
    %c3_30 = arith.constant 3 : index
    %c0_31 = arith.constant 0 : index
    %c0_32 = arith.constant 0 : index
    %96 = vector.load %arg5[%c3_30, %c0_31, %c0_32] : memref<5x8x128xf32, #tpu.memory_space<vmem>>, vector<1x8x128xf32>
    %97 = vector.shape_cast %96 : vector<1x8x128xf32> to vector<8x128xf32>
    %98 = arith.mulf %28, %28 : vector<3x8x128xf32>
    %99 = vector.extract_strided_slice %98 {offsets = [0, 0, 0], sizes = [1, 8, 128], strides = [1, 1, 1]} : vector<3x8x128xf32> to vector<1x8x128xf32>
    %100 = vector.shape_cast %99 : vector<1x8x128xf32> to vector<8x128xf32>
    %101 = vector.extract_strided_slice %98 {offsets = [1, 0, 0], sizes = [1, 8, 128], strides = [1, 1, 1]} : vector<3x8x128xf32> to vector<1x8x128xf32>
    %102 = vector.shape_cast %101 : vector<1x8x128xf32> to vector<8x128xf32>
    %103 = arith.addf %100, %102 : vector<8x128xf32>
    %104 = vector.extract_strided_slice %98 {offsets = [2, 0, 0], sizes = [1, 8, 128], strides = [1, 1, 1]} : vector<3x8x128xf32> to vector<1x8x128xf32>
    %105 = vector.shape_cast %104 : vector<1x8x128xf32> to vector<8x128xf32>
    %106 = arith.addf %103, %105 : vector<8x128xf32>
    %107 = arith.addf %97, %106 : vector<8x128xf32>
    %c3_33 = arith.constant 3 : index
    %c0_34 = arith.constant 0 : index
    %c0_35 = arith.constant 0 : index
    %108 = vector.load %arg5[%c3_33, %c0_34, %c0_35] : memref<5x8x128xf32, #tpu.memory_space<vmem>>, vector<1x8x128xf32>
    %109 = vector.shape_cast %108 : vector<1x8x128xf32> to vector<8x128xf32>
    %110 = vector.shape_cast %107 : vector<8x128xf32> to vector<1x8x128xf32>
    tpu.vector_store %arg5[%c3_33, %c0_34, %c0_35], %110 {strides = array<i32>} : memref<5x8x128xf32, #tpu.memory_space<vmem>>, vector<1x8x128xf32>,
    %c4 = arith.constant 4 : index
    %c0_36 = arith.constant 0 : index
    %c0_37 = arith.constant 0 : index
    %111 = vector.load %arg5[%c4, %c0_36, %c0_37] : memref<5x8x128xf32, #tpu.memory_space<vmem>>, vector<1x8x128xf32>
    %112 = vector.shape_cast %111 : vector<1x8x128xf32> to vector<8x128xf32>
    %113 = arith.mulf %50, %50 : vector<8x128xf32>
    %114 = arith.addf %112, %113 : vector<8x128xf32>
    %c4_38 = arith.constant 4 : index
    %c0_39 = arith.constant 0 : index
    %c0_40 = arith.constant 0 : index
    %115 = vector.load %arg5[%c4_38, %c0_39, %c0_40] : memref<5x8x128xf32, #tpu.memory_space<vmem>>, vector<1x8x128xf32>
    %116 = vector.shape_cast %115 : vector<1x8x128xf32> to vector<8x128xf32>
    %117 = vector.shape_cast %114 : vector<8x128xf32> to vector<1x8x128xf32>
    tpu.vector_store %arg5[%c4_38, %c0_39, %c0_40], %117 {strides = array<i32>} : memref<5x8x128xf32, #tpu.memory_space<vmem>>, vector<1x8x128xf32>,
    %c0_i32_41 = arith.constant 0 : i32
    %118 = arith.cmpi eq, %arg0, %c0_i32_41 : i32
    %119 = arith.extui %118 : i1 to i32
    %c0_i32_42 = arith.constant 0 : i32
    %120 = arith.cmpi ne, %119, %c0_i32_42 : i32
    scf.if %120 {
      %c0_43 = arith.constant 0 : index
      %c0_44 = arith.constant 0 : index
      %c0_45 = arith.constant 0 : index
      %121 = vector.load %arg5[%c0_43, %c0_44, %c0_45] : memref<5x8x128xf32, #tpu.memory_space<vmem>>, vector<1x8x128xf32>
      %122 = vector.shape_cast %121 : vector<1x8x128xf32> to vector<8x128xf32>
      %123 = vector.shape_cast %122 : vector<8x128xf32> to vector<1x8x128xf32>
      %cst_46 = arith.constant dense<0.000000e+00> : vector<1xf32>
      %124 = vector.multi_reduction <add>, %123, %cst_46 [1, 2] : vector<1x8x128xf32> to vector<1xf32>
      %125 = vector.shape_cast %124 : vector<1xf32> to vector<1x1x1xf32>
      %126 = vector.extract %125[0, 0, 0] : f32 from vector<1x1x1xf32>
      %cst_47 = arith.constant 0.0416666679 : f32
      %127 = arith.mulf %126, %cst_47 : f32
      %c1_48 = arith.constant 1 : index
      %c0_49 = arith.constant 0 : index
      %c0_50 = arith.constant 0 : index
      %128 = vector.load %arg5[%c1_48, %c0_49, %c0_50] : memref<5x8x128xf32, #tpu.memory_space<vmem>>, vector<1x8x128xf32>
      %129 = vector.shape_cast %128 : vector<1x8x128xf32> to vector<8x128xf32>
      %130 = vector.shape_cast %129 : vector<8x128xf32> to vector<1x8x128xf32>
      %cst_51 = arith.constant dense<0.000000e+00> : vector<1xf32>
      %131 = vector.multi_reduction <add>, %130, %cst_51 [1, 2] : vector<1x8x128xf32> to vector<1xf32>
      %132 = vector.shape_cast %131 : vector<1xf32> to vector<1x1x1xf32>
      %133 = vector.extract %132[0, 0, 0] : f32 from vector<1x1x1xf32>
      %cst_52 = arith.constant 0.0416666679 : f32
      %134 = arith.mulf %133, %cst_52 : f32
      %c2_53 = arith.constant 2 : index
      %c0_54 = arith.constant 0 : index
      %c0_55 = arith.constant 0 : index
      %135 = vector.load %arg5[%c2_53, %c0_54, %c0_55] : memref<5x8x128xf32, #tpu.memory_space<vmem>>, vector<1x8x128xf32>
      %136 = vector.shape_cast %135 : vector<1x8x128xf32> to vector<8x128xf32>
      %137 = vector.shape_cast %136 : vector<8x128xf32> to vector<1x8x128xf32>
      %cst_56 = arith.constant dense<0.000000e+00> : vector<1xf32>
      %138 = vector.multi_reduction <add>, %137, %cst_56 [1, 2] : vector<1x8x128xf32> to vector<1xf32>
      %139 = vector.shape_cast %138 : vector<1xf32> to vector<1x1x1xf32>
      %140 = vector.extract %139[0, 0, 0] : f32 from vector<1x1x1xf32>
      %cst_57 = arith.constant 0.0416666679 : f32
      %141 = arith.mulf %140, %cst_57 : f32
      %c3_58 = arith.constant 3 : index
      %c0_59 = arith.constant 0 : index
      %c0_60 = arith.constant 0 : index
      %142 = vector.load %arg5[%c3_58, %c0_59, %c0_60] : memref<5x8x128xf32, #tpu.memory_space<vmem>>, vector<1x8x128xf32>
      %143 = vector.shape_cast %142 : vector<1x8x128xf32> to vector<8x128xf32>
      %144 = vector.shape_cast %143 : vector<8x128xf32> to vector<1x8x128xf32>
      %cst_61 = arith.constant dense<0.000000e+00> : vector<1xf32>
      %145 = vector.multi_reduction <add>, %144, %cst_61 [1, 2] : vector<1x8x128xf32> to vector<1xf32>
      %146 = vector.shape_cast %145 : vector<1xf32> to vector<1x1x1xf32>
      %147 = vector.extract %146[0, 0, 0] : f32 from vector<1x1x1xf32>
      %cst_62 = arith.constant 0.0416666679 : f32
      %148 = arith.mulf %147, %cst_62 : f32
      %c4_63 = arith.constant 4 : index
      %c0_64 = arith.constant 0 : index
      %c0_65 = arith.constant 0 : index
      %149 = vector.load %arg5[%c4_63, %c0_64, %c0_65] : memref<5x8x128xf32, #tpu.memory_space<vmem>>, vector<1x8x128xf32>
      %150 = vector.shape_cast %149 : vector<1x8x128xf32> to vector<8x128xf32>
      %151 = vector.shape_cast %150 : vector<8x128xf32> to vector<1x8x128xf32>
      %cst_66 = arith.constant dense<0.000000e+00> : vector<1xf32>
      %152 = vector.multi_reduction <add>, %151, %cst_66 [1, 2] : vector<1x8x128xf32> to vector<1xf32>
      %153 = vector.shape_cast %152 : vector<1xf32> to vector<1x1x1xf32>
      %154 = vector.extract %153[0, 0, 0] : f32 from vector<1x1x1xf32>
      %cst_67 = arith.constant 1.250000e-01 : f32
      %155 = arith.mulf %154, %cst_67 : f32
      %c0_68 = arith.constant 0 : index
      %156 = memref.load %arg4[%c0_68] : memref<8xf32, #tpu.memory_space<smem>>
      memref.store %127, %arg4[%c0_68] : memref<8xf32, #tpu.memory_space<smem>>
      %c1_69 = arith.constant 1 : index
      %157 = memref.load %arg4[%c1_69] : memref<8xf32, #tpu.memory_space<smem>>
      memref.store %134, %arg4[%c1_69] : memref<8xf32, #tpu.memory_space<smem>>
      %c2_70 = arith.constant 2 : index
      %158 = memref.load %arg4[%c2_70] : memref<8xf32, #tpu.memory_space<smem>>
      memref.store %141, %arg4[%c2_70] : memref<8xf32, #tpu.memory_space<smem>>
      %c3_71 = arith.constant 3 : index
      %159 = memref.load %arg4[%c3_71] : memref<8xf32, #tpu.memory_space<smem>>
      memref.store %148, %arg4[%c3_71] : memref<8xf32, #tpu.memory_space<smem>>
      %c4_72 = arith.constant 4 : index
      %160 = memref.load %arg4[%c4_72] : memref<8xf32, #tpu.memory_space<smem>>
      memref.store %155, %arg4[%c4_72] : memref<8xf32, #tpu.memory_space<smem>>
      %c0_73 = arith.constant 0 : index
      %161 = memref.load %arg1[%c0_73] : memref<8xf32, #tpu.memory_space<smem>>
      %162 = arith.mulf %127, %161 : f32
      %c1_74 = arith.constant 1 : index
      %163 = memref.load %arg1[%c1_74] : memref<8xf32, #tpu.memory_space<smem>>
      %164 = arith.mulf %134, %163 : f32
      %165 = arith.addf %162, %164 : f32
      %c2_75 = arith.constant 2 : index
      %166 = memref.load %arg1[%c2_75] : memref<8xf32, #tpu.memory_space<smem>>
      %167 = arith.mulf %141, %166 : f32
      %168 = arith.addf %165, %167 : f32
      %c3_76 = arith.constant 3 : index
      %169 = memref.load %arg1[%c3_76] : memref<8xf32, #tpu.memory_space<smem>>
      %170 = arith.mulf %148, %169 : f32
      %171 = arith.addf %168, %170 : f32
      %c4_77 = arith.constant 4 : index
      %172 = memref.load %arg1[%c4_77] : memref<8xf32, #tpu.memory_space<smem>>
      %173 = arith.mulf %155, %172 : f32
      %174 = arith.addf %171, %173 : f32
      %c5 = arith.constant 5 : index
      %175 = memref.load %arg4[%c5] : memref<8xf32, #tpu.memory_space<smem>>
      memref.store %174, %arg4[%c5] : memref<8xf32, #tpu.memory_space<smem>>
      %cst_78 = arith.constant 0.000000e+00 : f32
      %c6 = arith.constant 6 : index
      %176 = memref.load %arg4[%c6] : memref<8xf32, #tpu.memory_space<smem>>
      memref.store %cst_78, %arg4[%c6] : memref<8xf32, #tpu.memory_space<smem>>
      %cst_79 = arith.constant 0.000000e+00 : f32
      %c7 = arith.constant 7 : index
      %177 = memref.load %arg4[%c7] : memref<8xf32, #tpu.memory_space<smem>>
      memref.store %cst_79, %arg4[%c7] : memref<8xf32, #tpu.memory_space<smem>>
    } else {
    }
    return
  }
  func.func @transform_0(%arg0: i32) -> i32 {
    %c0_i32 = arith.constant 0 : i32
    %c0_i32_0 = arith.constant 0 : i32
    return %c0_i32 : i32
  }
  func.func @transform_1(%arg0: i32) -> (i32, i32, i32) {
    %c0_i32 = arith.constant 0 : i32
    %c0_i32_0 = arith.constant 0 : i32
    %c0_i32_1 = arith.constant 0 : i32
    return %c0_i32, %c0_i32_0, %arg0 : i32, i32, i32
  }
  func.func @transform_2(%arg0: i32) -> (i32, i32, i32) {
    %c0_i32 = arith.constant 0 : i32
    %c0_i32_0 = arith.constant 0 : i32
    %c0_i32_1 = arith.constant 0 : i32
    return %c0_i32, %c0_i32_0, %arg0 : i32, i32, i32
  }
  func.func @transform_3(%arg0: i32) -> i32 {
    %c0_i32 = arith.constant 0 : i32
    %c0_i32_0 = arith.constant 0 : i32
    return %c0_i32 : i32
  }
}

</mosaic_0001>

<llo_original>
// kernel: tpu_custom_call.1
$region0: #{tpu_custom_call.1}
  #allocation0 [shape = 'u32[]', space=smem, size = 0x4, offset = 0x4, fixed_abs, tag = 'smem constant byte address 0x4 - core index']
  #allocation1 [shape = 'u32[144,128]{1,0:T(1,128)}', space=vmem, size = 0x12000, scoped, tag = 'internal scratch']
  #allocation2 [shape = 'f32[5,8,128]{2,1,0:T(8,128)}', space=vmem, size = 0x5000, scoped, tag = 'scratch operand']
  %s0 = inlined_call_operand.hbm [shape: f32[8], index: 0, kind: input, shape index: {}]
  %s1 = inlined_call_operand.hbm [shape: f32[6,8,128], index: 1, kind: input, shape index: {}]
  %s2 = inlined_call_operand.hbm [shape: f32[6,8,128], index: 2, kind: input, shape index: {}]
  %s3 = inlined_call_operand.hbm [shape: f32[8], index: 3, kind: output, shape index: {}]
  %s4 = sld [smem:[#allocation0]]
  $region42: #{tpu_custom_call.1} parent=0
    _
  %s6 = ssub.s32 1, %s4
  %s7 = scalar_select 0, %s6, %s4
  $region1: #{tpu_custom_call.1} parent=0
    #allocation3 [shape = 'u8[512]{0}', space=smem, size = 0x200, scoped, tag = 'input window, operand 0, single buffered']
    #allocation4 [shape = 's32[1]{0}', space=sflag, size = 0x4, scoped, tag = 'scoped memory for tpu_custom_call.1']
    #allocation5 [shape = 's32[1]{0}', space=sflag, size = 0x4, scoped, tag = 'scoped memory for tpu_custom_call.1']
    #allocation6 [shape = 's32[1]{0}', space=sflag, size = 0x4, scoped, tag = 'scoped memory for tpu_custom_call.1']
    #allocation7 [shape = 'u8[24576]{0}', space=vmem, size = 0x6000, scoped, tag = 'input window, operand 1, single buffered']
    #allocation8 [shape = 'u8[24576]{0}', space=vmem, size = 0x6000, scoped, tag = 'input window, operand 2, single buffered']
    #allocation9 [shape = 's32[1]{0}', space=sflag, size = 0x4, scoped, tag = 'scoped memory for tpu_custom_call.1']
    #allocation10 [shape = 'u8[512]{0}', space=smem, size = 0x200, scoped, tag = 'output window, operand 0, single buffered']
    %8 = vsyncpa [#allocation5], 0
    %9 = vsyncpa [#allocation4], 0
    %10 = vsyncpa [#allocation9], 0
    %11 = vsyncpa [#allocation6], 0
    // Predicated region
    $region2: #{tpu_custom_call.1} parent=1 // pred_check
      _
    $region3: #{tpu_custom_call.1} parent=1 // pred_check_branch
      %13 = sbr.rel (0) target = $region5
    $region4: #{tpu_custom_call.1} parent=1 // pred_region
      %s15 = ssub.s32 16, 16
      %16 = vsyncadd [#allocation5], %s15
      %19 = dma.hbm_to_smem %s0, 16, [#allocation3], [#allocation5]
    $region5: #{tpu_custom_call.1} parent=1 // pred_fallthru
      _
    // Predicated region
    $region6: #{tpu_custom_call.1} parent=1 // pred_check
      _
    $region7: #{tpu_custom_call.1} parent=1 // pred_check_branch
      %21 = sbr.rel (0) target = $region9
    $region8: #{tpu_custom_call.1} parent=1 // pred_region
      %s23 = ssub.s32 768, 768
      %24 = vsyncadd [#allocation4], %s23
      %s25 = sshll.u32 [#allocation7], 4
      %s26 = int_to_ptr.vmem [resolvable:$true] %s25
      %31 = dma.hbm_to_vmem [thread:$0]  %s1, 768, %s26, [#allocation4], 128, 128, 8
    $region9: #{tpu_custom_call.1} parent=1 // pred_fallthru
      _
    // Predicated region
    $region10: #{tpu_custom_call.1} parent=1 // pred_check
      _
    $region11: #{tpu_custom_call.1} parent=1 // pred_check_branch
      %33 = sbr.rel (0) target = $region13
    $region12: #{tpu_custom_call.1} parent=1 // pred_region
      %s35 = ssub.s32 768, 768
      %36 = vsyncadd [#allocation9], %s35
      %s37 = sshll.u32 [#allocation8], 4
      %s38 = int_to_ptr.vmem [resolvable:$true] %s37
      %43 = dma.hbm_to_vmem [thread:$0]  %s2, 768, %s38, [#allocation9], 128, 128, 8
    $region13: #{tpu_custom_call.1} parent=1 // pred_fallthru
      _
    // Predicated region
    $region14: #{tpu_custom_call.1} parent=1 // pred_check
      _
    $region15: #{tpu_custom_call.1} parent=1 // pred_check_branch
      %45 = sbr.rel (0) target = $region17
    $region16: #{tpu_custom_call.1} parent=1 // pred_region
      %46 = dma.done [#allocation5], 16
    $region17: #{tpu_custom_call.1} parent=1 // pred_fallthru
      _
    // Predicated region
    $region18: #{tpu_custom_call.1} parent=1 // pred_check
      _
    $region19: #{tpu_custom_call.1} parent=1 // pred_check_branch
      %48 = sbr.rel (0) target = $region21
    $region20: #{tpu_custom_call.1} parent=1 // pred_region
      %49 = dma.done [#allocation4], 768
    $region21: #{tpu_custom_call.1} parent=1 // pred_fallthru
      _
    // Predicated region
    $region22: #{tpu_custom_call.1} parent=1 // pred_check
      _
    $region23: #{tpu_custom_call.1} parent=1 // pred_check_branch
      %51 = sbr.rel (0) target = $region25
    $region24: #{tpu_custom_call.1} parent=1 // pred_region
      %52 = dma.done [#allocation9], 768
    $region25: #{tpu_custom_call.1} parent=1 // pred_fallthru
      _
    %53 = sfence
    %p54 = scmp.eq.s32.totalorder 0, 0
    // Predicated region
    $region26: #{tpu_custom_call.1} parent=1 // pred_check
      %p55 = pneg %p54
    $region27: #{tpu_custom_call.1} parent=1 // pred_check_branch
      %57 = sbr.rel (%p55) target = $region29
    $region28: #{tpu_custom_call.1} parent=1 // pred_region
      %58 = vst [vmem:[#allocation2] sm:$0xff] 0.0
      %59 = vst [vmem:[#allocation2 + $0x8] sm:$0xff] 0.0
      %60 = vst [vmem:[#allocation2 + $0x10] sm:$0xff] 0.0
      %61 = vst [vmem:[#allocation2 + $0x18] sm:$0xff] 0.0
      %62 = vst [vmem:[#allocation2 + $0x20] sm:$0xff] 0.0
    $region29: #{tpu_custom_call.1} parent=1 // pred_fallthru
      _
    %v63 = vld [vmem:[#allocation7] sm:$0xff]
    %v64 = vld [vmem:[#allocation7 + $0x8] sm:$0xff]
    %v65 = vld [vmem:[#allocation7 + $0x10] sm:$0xff]
    %s66 = scalar_lea.vmem [#allocation7], 24
    %v67 = vld [vmem:[%s66] sm:$0xff]
    %v68 = vld [vmem:[%s66 + $0x8] sm:$0xff]
    %v69 = vld [vmem:[%s66 + $0x10] sm:$0xff]
    %v70 = vld [vmem:[#allocation8] sm:$0xff]
    %v71 = vld [vmem:[#allocation8 + $0x8] sm:$0xff]
    %v72 = vld [vmem:[#allocation8 + $0x10] sm:$0xff]
    %s73 = scalar_lea.vmem [#allocation8], 24
    %v74 = vld [vmem:[%s73] sm:$0xff]
    %v75 = vld [vmem:[%s73 + $0x8] sm:$0xff]
    %v76 = vld [vmem:[%s73 + $0x10] sm:$0xff]
    %v77 = vsub.f32 %v70, 0.5
    %v78 = vsub.f32 %v71, 0.5
    %v79 = vsub.f32 %v72, 0.5
    %v80 = vand.u32 2147483647, %v77
    %v81 = vand.u32 2147483647, %v78
    %v82 = vand.u32 2147483647, %v79
    %v83 = vsub.f32 %v63, 0.5
    %v84 = vsub.f32 %v64, 0.5
    %v85 = vsub.f32 %v65, 0.5
    %v86 = vand.u32 2147483647, %v83
    %v87 = vand.u32 2147483647, %v84
    %v88 = vand.u32 2147483647, %v85
    %v89 = vsub.f32 %v80, %v86
    %v90 = vsub.f32 %v81, %v87
    %v91 = vsub.f32 %v82, %v88
    %v92 = vsub.f32 %v74, 0.5
    %v93 = vsub.f32 %v75, 0.5
    %v94 = vsub.f32 %v76, 0.5
    %v95 = vand.u32 2147483647, %v92
    %v96 = vand.u32 2147483647, %v93
    %v97 = vand.u32 2147483647, %v94
    %v98 = vsub.f32 %v67, 0.5
    %v99 = vsub.f32 %v68, 0.5
    %v100 = vsub.f32 %v69, 0.5
    %v101 = vand.u32 2147483647, %v98
    %v102 = vand.u32 2147483647, %v99
    %v103 = vand.u32 2147483647, %v100
    %v104 = vsub.f32 %v95, %v101
    %v105 = vsub.f32 %v96, %v102
    %v106 = vsub.f32 %v97, %v103
    %v107 = vsub.f32 %v70, %v74
    %v108 = vsub.f32 %v71, %v75
    %v109 = vsub.f32 %v72, %v76
    %v110 = vand.u32 2147483647, %v107
    %v111 = vand.u32 2147483647, %v108
    %v112 = vand.u32 2147483647, %v109
    %v113 = vsub.f32 %v67, %v70
    %v114 = vsub.f32 %v68, %v71
    %v115 = vsub.f32 %v69, %v72
    %v116 = vand.u32 2147483647, %v113
    %v117 = vand.u32 2147483647, %v114
    %v118 = vand.u32 2147483647, %v115
    %v119 = vsub.f32 %v110, %v116
    %v120 = vsub.f32 %v111, %v117
    %v121 = vsub.f32 %v112, %v118
    %v122 = vsub.f32 %v63, %v74
    %v123 = vsub.f32 %v64, %v75
    %v124 = vsub.f32 %v65, %v76
    %v125 = vand.u32 2147483647, %v122
    %v126 = vand.u32 2147483647, %v123
    %v127 = vand.u32 2147483647, %v124
    %v128 = vsub.f32 %v110, %v125
    %v129 = vsub.f32 %v111, %v126
    %v130 = vsub.f32 %v112, %v127
    %v131 = vsub.f32 %v63, %v67
    %v132 = vsub.f32 %v64, %v68
    %v133 = vsub.f32 %v65, %v69
    %v134 = vmul.f32 %v131, %v131
    %v135 = vmul.f32 %v132, %v132
    %v136 = vmul.f32 %v133, %v133
    %v137 = vmul.f32 %v107, %v107
    %v138 = vmul.f32 %v108, %v108
    %v139 = vmul.f32 %v109, %v109
    %v140 = vadd.f32 %v134, %v135
    %v141 = vadd.f32 %v140, %v136
    %v142 = vrsqrt.pop %v141
    %v143 = vmul.f32 %v141, %v142
    %vm144 = vcmp.eq.f32.partialorder %v141, inf
    %v145 = vsel %vm144, %v141, %v143
    %vm146 = vcmp.eq.f32.partialorder %v141, 0.0
    %v147 = vand.u32 %v141, 2147483648
    %v148 = vsel %vm146, %v147, %v145
    %v149 = vadd.f32 %v137, %v138
    %v150 = vadd.f32 %v149, %v139
    %v151 = vrsqrt.pop %v150
    %v152 = vmul.f32 %v150, %v151
    %vm153 = vcmp.eq.f32.partialorder %v150, inf
    %v154 = vsel %vm153, %v150, %v152
    %vm155 = vcmp.eq.f32.partialorder %v150, 0.0
    %v156 = vand.u32 %v150, 2147483648
    %v157 = vsel %vm155, %v156, %v154
    %v158 = vsub.f32 %v148, %v157
    %v159 = vld [vmem:[#allocation2] sm:$0xff]
    %v160 = vmul.f32 %v89, %v89
    %v161 = vmul.f32 %v90, %v90
    %v162 = vmul.f32 %v91, %v91
    %v163 = vadd.f32 %v160, %v161
    %v164 = vadd.f32 %v163, %v162
    %v165 = vadd.f32 %v159, %v164
    %166 = vst [vmem:[#allocation2] sm:$0xff] %v165
    %s167 = scalar_lea.vmem [#allocation2], 8
    %v168 = vld [vmem:[%s167] sm:$0xff]
    %v169 = vmul.f32 %v104, %v104
    %v170 = vmul.f32 %v105, %v105
    %v171 = vmul.f32 %v106, %v106
    %v172 = vadd.f32 %v169, %v170
    %v173 = vadd.f32 %v172, %v171
    %v174 = vadd.f32 %v168, %v173
    %175 = vst [vmem:[%s167] sm:$0xff] %v174
    %s176 = scalar_lea.vmem [#allocation2], 16
    %v177 = vld [vmem:[%s176] sm:$0xff]
    %v178 = vmul.f32 %v119, %v119
    %v179 = vmul.f32 %v120, %v120
    %v180 = vmul.f32 %v121, %v121
    %v181 = vadd.f32 %v178, %v179
    %v182 = vadd.f32 %v181, %v180
    %v183 = vadd.f32 %v177, %v182
    %184 = vst [vmem:[%s176] sm:$0xff] %v183
    %s185 = scalar_lea.vmem [#allocation2], 24
    %v186 = vld [vmem:[%s185] sm:$0xff]
    %v187 = vmul.f32 %v128, %v128
    %v188 = vmul.f32 %v129, %v129
    %v189 = vmul.f32 %v130, %v130
    %v190 = vadd.f32 %v187, %v188
    %v191 = vadd.f32 %v190, %v189
    %v192 = vadd.f32 %v186, %v191
    %193 = vst [vmem:[%s185] sm:$0xff] %v192
    %s194 = scalar_lea.vmem [#allocation2], 32
    %v195 = vld [vmem:[%s194] sm:$0xff]
    %v196 = vmul.f32 %v158, %v158
    %v197 = vadd.f32 %v195, %v196
    %198 = vst [vmem:[%s194] sm:$0xff] %v197
    // Predicated region
    $region30: #{tpu_custom_call.1} parent=1 // pred_check
      %p199 = pneg %p54
    $region31: #{tpu_custom_call.1} parent=1 // pred_check_branch
      %201 = sbr.rel (%p199) target = $region33
    $region32: #{tpu_custom_call.1} parent=1 // pred_region
      %v202 = vld [vmem:[#allocation2] sm:$0xff]
      %203 = vadd.xlane.f32.xlu0 %v202
      %v204 = vpop.xlane.xlu0 %203
      %v205 = vrot.slane %v204, 4
      %v206 = vadd.f32 %v204, %v205
      %v207 = vrot.slane %v206, 2
      %v208 = vadd.f32 %v206, %v207
      %v209 = vrot.slane %v208, 1
      %v210 = vadd.f32 %v208, %v209
      %s211 = vtos %v210
      %s212 = smul.f32 %s211, 0.041666668
      %v213 = vld [vmem:[%s167] sm:$0xff]
      %214 = vadd.xlane.f32.xlu0 %v213
      %v215 = vpop.xlane.xlu0 %214
      %v216 = vrot.slane %v215, 4
      %v217 = vadd.f32 %v215, %v216
      %v218 = vrot.slane %v217, 2
      %v219 = vadd.f32 %v217, %v218
      %v220 = vrot.slane %v219, 1
      %v221 = vadd.f32 %v219, %v220
      %s222 = vtos %v221
      %s223 = smul.f32 %s222, 0.041666668
      %v224 = vld [vmem:[%s176] sm:$0xff]
      %225 = vadd.xlane.f32.xlu0 %v224
      %v226 = vpop.xlane.xlu0 %225
      %v227 = vrot.slane %v226, 4
      %v228 = vadd.f32 %v226, %v227
      %v229 = vrot.slane %v228, 2
      %v230 = vadd.f32 %v228, %v229
      %v231 = vrot.slane %v230, 1
      %v232 = vadd.f32 %v230, %v231
      %s233 = vtos %v232
      %s234 = smul.f32 %s233, 0.041666668
      %v235 = vld [vmem:[%s185] sm:$0xff]
      %236 = vadd.xlane.f32.xlu0 %v235
      %v237 = vpop.xlane.xlu0 %236
      %v238 = vrot.slane %v237, 4
      %v239 = vadd.f32 %v237, %v238
      %v240 = vrot.slane %v239, 2
      %v241 = vadd.f32 %v239, %v240
      %v242 = vrot.slane %v241, 1
      %v243 = vadd.f32 %v241, %v242
      %s244 = vtos %v243
      %s245 = smul.f32 %s244, 0.041666668
      %v246 = vld [vmem:[%s194] sm:$0xff]
      %247 = vadd.xlane.f32.xlu0 %v246
      %v248 = vpop.xlane.xlu0 %247
      %v249 = vrot.slane %v248, 4
      %v250 = vadd.f32 %v248, %v249
      %v251 = vrot.slane %v250, 2
      %v252 = vadd.f32 %v250, %v251
      %v253 = vrot.slane %v252, 1
      %v254 = vadd.f32 %v252, %v253
      %s255 = vtos %v254
      %s256 = smul.f32 %s255, 0.125
      %s257 = scalar_lea.smem [#allocation10], 0
      %258 = sst [smem:[%s257]] %s212
      %s259 = scalar_lea.smem [#allocation10], 1
      %260 = sst [smem:[%s259]] %s223
      %s261 = scalar_lea.smem [#allocation10], 2
      %262 = sst [smem:[%s261]] %s234
      %s263 = scalar_lea.smem [#allocation10], 3
      %264 = sst [smem:[%s263]] %s245
      %s265 = scalar_lea.smem [#allocation10], 4
      %266 = sst [smem:[%s265]] %s256
      %s267 = sld [smem:[#allocation3]]
      %s268 = smul.f32 %s212, %s267
      %s269 = sld [smem:[#allocation3 + $0x1]]
      %s270 = smul.f32 %s223, %s269
      %s271 = sadd.f32 %s268, %s270
      %s272 = sld [smem:[#allocation3 + $0x2]]
      %s273 = smul.f32 %s234, %s272
      %s274 = sadd.f32 %s271, %s273
      %s275 = sld [smem:[#allocation3 + $0x3]]
      %s276 = smul.f32 %s245, %s275
      %s277 = sadd.f32 %s274, %s276
      %s278 = sld [smem:[#allocation3 + $0x4]]
      %s279 = smul.f32 %s256, %s278
      %s280 = sadd.f32 %s277, %s279
      %s281 = scalar_lea.smem [#allocation10], 5
      %282 = sst [smem:[%s281]] %s280
      %s283 = scalar_lea.smem [#allocation10], 6
      %284 = sst [smem:[%s283]] 0.0
      %s285 = scalar_lea.smem [#allocation10], 7
      %286 = sst [smem:[%s285]] 0.0
    $region33: #{tpu_custom_call.1} parent=1 // pred_fallthru
      _
    // Predicated region
    $region34: #{tpu_custom_call.1} parent=1 // pred_check
      _
    $region35: #{tpu_custom_call.1} parent=1 // pred_check_branch
      %288 = sbr.rel (0) target = $region37
    $region36: #{tpu_custom_call.1} parent=1 // pred_region
      %s290 = ssub.s32 16, 16
      %291 = vsyncadd [#allocation6], %s290
      %294 = dma.smem_to_hbm [#allocation10], 16, %s3, [#allocation6]
    $region37: #{tpu_custom_call.1} parent=1 // pred_fallthru
      _
    // Predicated region
    $region38: #{tpu_custom_call.1} parent=1 // pred_check
      _
    $region39: #{tpu_custom_call.1} parent=1 // pred_check_branch
      %296 = sbr.rel (0) target = $region41
    $region40: #{tpu_custom_call.1} parent=1 // pred_region
      %297 = dma.done [#allocation6], 16
    $region41: #{tpu_custom_call.1} parent=1 // pred_fallthru
      _
    %298 = sfence
    %299 = vsyncpa [#allocation4], 1
    %300 = vsyncpa [#allocation9], 1
    %301 = vsyncpa [#allocation5], 1
    %302 = vsyncpa [#allocation6], 1

</llo_original>
